<compile_context>
chip_gen: v6e
topology: v6e:2x2x1
jax: 0.10.0
libtpu: 0.0.40
codegen_flags: <defaults>
</compile_context>

<pallas_src>
import math
import functools

import jax
import jax.numpy as jnp
import numpy as np
from jax.experimental import pallas as pl
from jax.experimental.pallas import tpu as pltpu


# ----------------------------------------------------------------------------
# Glue: unitary construction (tiny kron chains, parameter setup)
# ----------------------------------------------------------------------------
def _batched_kron(a, b):
    fb, m, n = a.shape
    _, p, q = b.shape
    return jnp.einsum("bij,bkl->bikjl", a, b).reshape(fb, m * p, n * q)


def build_unitaries(weight, phi, nw):
    """weight: (F, L, nw, 2) f32, phi: (F, L, nw) f32 -> (F, 2^nw, 2^nw) c64."""
    f_, num_layers = weight.shape[0], weight.shape[1]
    dq = 2 ** nw
    final = jnp.broadcast_to(jnp.eye(dq, dtype=jnp.complex64), (f_, dq, dq))
    for layer in range(num_layers):
        w = weight[:, layer]                                  # (F, nw, 2)
        angle = w[..., 0] * (math.pi / 2.0)
        cos_t = jnp.cos(angle).astype(jnp.complex64)
        sin_t = jnp.sin(angle).astype(jnp.complex64)
        e1 = jnp.exp(1j * phi[:, layer, :].astype(jnp.complex64))
        e2 = jnp.exp(1j * w[..., 1].astype(jnp.complex64))
        u00 = cos_t
        u01 = -sin_t * e2
        u10 = sin_t * e1
        u11 = cos_t * e1 * e2
        U = jnp.stack([jnp.stack([u00, u01], axis=-1),
                       jnp.stack([u10, u11], axis=-1)], axis=-2)  # (F, nw, 2, 2)
        kp = U[:, 0]
        for i in range(1, nw):
            kp = _batched_kron(kp, U[:, i])
        final = jnp.einsum("bij,bjk->bik", final, kp)
    return final


def pauli_z_diagonals(nw):
    """Diagonals of Z_w observables: (nw, 2^nw) float32 of +/-1."""
    dq = 2 ** nw
    k = jnp.arange(dq)
    bits = (k[None, :] >> (nw - 1 - jnp.arange(nw)[:, None])) & 1
    return (1 - 2 * bits).astype(jnp.float32)


# ----------------------------------------------------------------------------
# Pallas kernel: amplitude encoding + fused unitary apply + Z expectation
# ----------------------------------------------------------------------------
def _quanv_kernel(p_ref, w_ref, z_ref, o_ref, *, inv_temp):
    # p_ref: (CK, TB)       patch logits, patches on the lane axis
    # w_ref: (2*F*dq, CK)   stacked [Re(U_f); Im(U_f)] per filter (padded cols dropped)
    # z_ref: (Fnw, 2*F*dq)  block Pauli-Z diagonals (same block for re/im halves)
    # o_ref: (Fnw, TB)
    logits = p_ref[...] * inv_temp
    m = jnp.max(logits, axis=0, keepdims=True)
    # h = sqrt(exp(logits - m)) in a single EUP pass.
    h = jnp.exp(0.5 * (logits - m))                                       # (CK, TB)
    denom = jnp.sum(h * h, axis=0, keepdims=True)                         # (1, TB)
    psi = jnp.dot(w_ref[...], h, preferred_element_type=jnp.float32)      # (2Fdq, TB)
    prob = psi * psi                                                      # Re^2 / Im^2
    zp = jnp.dot(z_ref[...], prob, preferred_element_type=jnp.float32)    # (Fnw, TB)
    # normalize after both matmuls: broadcast over only Fnw rows.
    o_ref[...] = zp * pl.reciprocal(denom)


# ----------------------------------------------------------------------------
# Wrapper
# ----------------------------------------------------------------------------
def quanv1d_forward(x, weight, phi, *, kernel_size, stride, padding, dilation,
                    out_channels, temp=1.0, bias=None, tb=8192):
    bs, C, L = x.shape
    K = kernel_size
    CK = C * K
    nw = max(int(math.ceil(math.log2(max(CK, 2)))), 1)
    dq = 2 ** nw
    F = weight.shape[0]
    Fnw = F * nw
    two_fdq = 2 * F * dq

    # --- glue: unfold (nn.Unfold ordering: row c*K+k), TRANSPOSED to (CK, B) ---
    # TODO(synk): fusing this unfold into the kernel (halo-tile DMA from x_pad)
    # would cut input HBM traffic ~5-15x for K=3; kept on the glue side here.
    L_out = (L + 2 * padding - dilation * (K - 1) - 1) // stride + 1
    B = bs * L_out
    x_pad = jnp.pad(x, ((0, 0), (0, 0), (padding, padding)))
    idx = (jnp.arange(L_out) * stride)[:, None] + (jnp.arange(K) * dilation)[None, :]
    gathered = x_pad[:, :, idx]                                   # (bs, C, L_out, K)
    patches_T = jnp.transpose(gathered, (1, 3, 0, 2)).reshape(CK, B).astype(jnp.float32)

    # --- tile choice ---
    # Per-lane-column VMEM cost: double-buffered in/out blocks plus the
    # (2Fdq, TB) psi/prob temporaries.  Cap TB so the working set stays well
    # inside the default scoped VMEM limit on every generation (v7x: 64 MiB
    # physical / 32 MiB scoped default), so no vmem_limit override is needed.
    per_col_bytes = 4 * (2 * CK + 2 * Fnw + 2 * two_fdq)
    vmem_budget = 24 << 20
    tb_cap = max((vmem_budget // per_col_bytes) // 128 * 128, 128)
    tb_eff = min(max((tb // 128) * 128, 128), tb_cap)

    if B <= tb_eff:
        # small-B: single tile, rounded to a multiple of 128 (unmasked vst).
        TB = ((B + 127) // 128) * 128
        B_pad = TB
    else:
        TB = tb_eff
        B_pad = ((B + TB - 1) // TB) * TB          # grid >= 2 whenever B > TB
    if B_pad > B:
        # padded patch columns are zeros -> uniform softmax, finite, sliced off later
        patches_T = jnp.pad(patches_T, ((0, 0), (0, B_pad - B)))

    # --- glue: fused real/imag unitary LHS and block-Z observable matrix ---
    U = build_unitaries(weight, phi, nw)                          # (F, dq, dq) c64
    Ur = jnp.real(U).astype(jnp.float32)
    Ui = jnp.imag(U).astype(jnp.float32)
    W = jnp.stack([Ur, Ui], axis=1).reshape(two_fdq, dq)          # [Re_0;Im_0;Re_1;...]
    W_ck = W[:, :CK]           # padded basis states have zero amplitude -> drop columns

    zd = pauli_z_diagonals(nw)                                    # (nw, dq)
    eyeF = jnp.eye(F, dtype=jnp.float32)
    Zb = jnp.einsum("fg,wj->fwgj", eyeF, zd)[:, :, :, None, :]    # (F, nw, F, 1, dq)
    ZbigT = jnp.broadcast_to(Zb, (F, nw, F, 2, dq)).reshape(Fnw, two_fdq)

    # advisory cost estimate for XLA's scheduler
    cost = pl.CostEstimate(
        flops=int(B_pad * (2 * two_fdq * CK + 2 * Fnw * two_fdq + 6 * CK + 2 * Fnw)),
        transcendentals=int(B_pad * CK),
        bytes_accessed=int(4 * (CK * B_pad + Fnw * B_pad
                                + two_fdq * CK + Fnw * two_fdq)),
    )

    kern = functools.partial(_quanv_kernel, inv_temp=1.0 / float(temp))
    out_T = pl.pallas_call(
        kern,
        out_shape=jax.ShapeDtypeStruct((Fnw, B_pad), jnp.float32),
        grid_spec=pltpu.PrefetchScalarGridSpec(
            num_scalar_prefetch=0,
            grid=(B_pad // TB,),
            in_specs=[
                pl.BlockSpec((CK, TB), lambda i: (0, i)),
                pl.BlockSpec((two_fdq, CK), lambda i: (0, 0)),
                pl.BlockSpec((Fnw, two_fdq), lambda i: (0, 0)),
            ],
            out_specs=pl.BlockSpec((Fnw, TB), lambda i: (0, i)),
        ),
        compiler_params=pltpu.CompilerParams(dimension_semantics=("parallel",)),
        cost_estimate=cost,
    )(patches_T, W_ck, ZbigT)

    out = out_T[:out_channels, :B]                                # (out_channels, B)
    if bias is not None:
        out = out + bias[:, None]
    return out.reshape(out_channels, bs, L_out).transpose(1, 0, 2)


# ----------------------------------------------------------------------------
# Pure-JAX reference (for correctness check)
# ----------------------------------------------------------------------------
def reference_forward(x, weight, phi, *, kernel_size, stride, padding, dilation,
                      out_channels, temp=1.0):
    bs, C, L = x.shape
    K = kernel_size
    CK = C * K
    nw = max(int(math.ceil(math.log2(max(CK, 2)))), 1)
    dq = 2 ** nw
    L_out = (L + 2 * padding - dilation * (K - 1) - 1) // stride + 1
    x_pad = jnp.pad(x, ((0, 0), (0, 0), (padding, padding)))
    idx = (jnp.arange(L_out) * stride)[:, None] + (jnp.arange(K) * dilation)[None, :]
    patches = jnp.transpose(x_pad[:, :, idx], (0, 2, 1, 3)).reshape(bs * L_out, CK)
    s = jnp.sqrt(jax.nn.softmax(patches / temp, axis=1))
    s = jnp.pad(s, ((0, 0), (0, dq - CK))).astype(jnp.complex64)
    U = build_unitaries(weight, phi, nw)
    psi = jnp.einsum("bk,fjk->bfj", s, U)
    zd = pauli_z_diagonals(nw)
    out = jnp.einsum("bfj,wj->bfw", jnp.abs(psi) ** 2, zd)
    out = out.reshape(bs * L_out, -1)[:, :out_channels]
    return out.reshape(bs, L_out, out_channels).transpose(0, 2, 1)


# ----------------------------------------------------------------------------
if __name__ == "__main__":
    key = jax.random.PRNGKey(0)
    bs, C, L = 2, 4, 16
    out_channels, K, stride, padding, dilation = 6, 3, 1, 1, 1

    CK = C * K
    nw = max(int(math.ceil(math.log2(max(CK, 2)))), 1)          # = 4
    F = (out_channels + nw - 1) // nw                            # = 2
    num_layers = K

    k1, k2, k3 = jax.random.split(key, 3)
    x = jax.random.normal(k1, (bs, C, L), dtype=jnp.float32)

    # deterministic Kaiming-uniform-like init for weight (shape from __init__)
    fan_in = num_layers * nw * 2
    bound = math.sqrt(6.0 / fan_in)
    weight = jax.random.uniform(k2, (F, num_layers, nw, 2),
                                minval=-bound, maxval=bound, dtype=jnp.float32)
    phi = jax.random.uniform(k3, (F, num_layers, nw), dtype=jnp.float32)

    # TODO(synk): noise=True / shots>0 paths (host-side RNG, random depolarizing
    # channel, shot-noise renormalization) are disabled here, matching defaults.
    out = quanv1d_forward(x, weight, phi, kernel_size=K, stride=stride,
                          padding=padding, dilation=dilation,
                          out_channels=out_channels, temp=1.0, bias=None)
    out = jax.block_until_ready(out)

    ref = reference_forward(x, weight, phi, kernel_size=K, stride=stride,
                            padding=padding, dilation=dilation,
                            out_channels=out_channels, temp=1.0)
    assert out.shape == (bs, out_channels, L)
    np.testing.assert_allclose(np.asarray(out), np.asarray(ref),
                               rtol=1e-4, atol=1e-4)
    print("KERNEL_OK")
</pallas_src>

<mosaic_0001>
module attributes {stable_mosaic.version = 11 : i64} {
  func.func @_quanv_kernel(%arg0: i32, %arg1: memref<12x128xf32, #tpu.memory_space<vmem>>, %arg2: memref<64x12xf32, #tpu.memory_space<vmem>>, %arg3: memref<8x64xf32, #tpu.memory_space<vmem>>, %arg4: memref<8x128xf32, #tpu.memory_space<vmem>>) attributes {dimension_semantics = [#tpu.dimension_semantics<parallel>], iteration_bounds = array<i64: 1>, scalar_prefetch = 0 : i64, scratch_operands = 0 : i64, tpu.core_type = #tpu.core_type<tc>, window_params = [{transform_indices = @transform_0, window_bounds = array<i64: 12, 128>}, {pipeline_mode = #tpu.pipeline_mode<synchronous>, transform_indices = @transform_1, window_bounds = array<i64: 64, 12>}, {pipeline_mode = #tpu.pipeline_mode<synchronous>, transform_indices = @transform_2, window_bounds = array<i64: 8, 64>}, {transform_indices = @transform_3, window_bounds = array<i64: 8, 128>}]} {
    %c0 = arith.constant 0 : index
    %c0_0 = arith.constant 0 : index
    %0 = vector.load %arg1[%c0, %c0_0] : memref<12x128xf32, #tpu.memory_space<vmem>>, vector<12x128xf32>
    %cst = arith.constant 1.000000e+00 : f32
    %1 = vector.broadcast %cst : f32 to vector<12x128xf32>
    %2 = arith.mulf %0, %1 : vector<12x128xf32>
    %cst_1 = arith.constant dense<0xFF800000> : vector<128xf32>
    %3 = vector.multi_reduction <maximumf>, %2, %cst_1 [0] : vector<12x128xf32> to vector<128xf32>
    %4 = vector.shape_cast %3 : vector<128xf32> to vector<1x128xf32>
    %5 = vector.broadcast %4 : vector<1x128xf32> to vector<12x128xf32>
    %6 = arith.subf %2, %5 : vector<12x128xf32>
    %cst_2 = arith.constant 5.000000e-01 : f32
    %7 = vector.broadcast %cst_2 : f32 to vector<12x128xf32>
    %8 = arith.mulf %7, %6 : vector<12x128xf32>
    %9 = math.exp %8 : vector<12x128xf32>
    %10 = arith.mulf %9, %9 : vector<12x128xf32>
    %cst_3 = arith.constant dense<0.000000e+00> : vector<128xf32>
    %11 = vector.multi_reduction <add>, %10, %cst_3 [0] : vector<12x128xf32> to vector<128xf32>
    %12 = vector.shape_cast %11 : vector<128xf32> to vector<1x128xf32>
    %c0_4 = arith.constant 0 : index
    %c0_5 = arith.constant 0 : index
    %13 = vector.load %arg2[%c0_4, %c0_5] : memref<64x12xf32, #tpu.memory_space<vmem>>, vector<64x12xf32>
    %cst_6 = arith.constant dense<0.000000e+00> : vector<64x128xf32>
    %14 = tpu.matmul %13, %9, %cst_6 {dimension_numbers = #tpu.dot_dimension_numbers<[1], [0], [0], [1], [0, 0, 1, 1], [], []>} : vector<64x12xf32>, vector<12x128xf32>, vector<64x128xf32> -> vector<64x128xf32>
    %15 = arith.mulf %14, %14 : vector<64x128xf32>
    %c0_7 = arith.constant 0 : index
    %c0_8 = arith.constant 0 : index
    %16 = vector.load %arg3[%c0_7, %c0_8] : memref<8x64xf32, #tpu.memory_space<vmem>>, vector<8x64xf32>
    %cst_9 = arith.constant dense<0.000000e+00> : vector<8x128xf32>
    %17 = tpu.matmul %16, %15, %cst_9 {dimension_numbers = #tpu.dot_dimension_numbers<[1], [0], [0], [1], [0, 0, 1, 1], [], []>} : vector<8x64xf32>, vector<64x128xf32>, vector<8x128xf32> -> vector<8x128xf32>
    %18 = tpu.reciprocal %12 : vector<1x128xf32> -> vector<1x128xf32>
    %19 = vector.broadcast %18 : vector<1x128xf32> to vector<8x128xf32>
    %20 = arith.mulf %17, %19 : vector<8x128xf32>
    %c0_10 = arith.constant 0 : index
    %c0_11 = arith.constant 0 : index
    %21 = vector.load %arg4[%c0_10, %c0_11] : memref<8x128xf32, #tpu.memory_space<vmem>>, vector<8x128xf32>
    tpu.vector_store %arg4[%c0_10, %c0_11], %20 {strides = array<i32>} : memref<8x128xf32, #tpu.memory_space<vmem>>, vector<8x128xf32>,
    return
  }
  func.func @transform_0(%arg0: i32) -> (i32, i32) {
    %c0_i32 = arith.constant 0 : i32
    %c0_i32_0 = arith.constant 0 : i32
    return %c0_i32, %arg0 : i32, i32
  }
  func.func @transform_1(%arg0: i32) -> (i32, i32) {
    %c0_i32 = arith.constant 0 : i32
    %c0_i32_0 = arith.constant 0 : i32
    %c0_i32_1 = arith.constant 0 : i32
    return %c0_i32, %c0_i32_0 : i32, i32
  }
  func.func @transform_2(%arg0: i32) -> (i32, i32) {
    %c0_i32 = arith.constant 0 : i32
    %c0_i32_0 = arith.constant 0 : i32
    %c0_i32_1 = arith.constant 0 : i32
    return %c0_i32, %c0_i32_0 : i32, i32
  }
  func.func @transform_3(%arg0: i32) -> (i32, i32) {
    %c0_i32 = arith.constant 0 : i32
    %c0_i32_0 = arith.constant 0 : i32
    return %c0_i32, %arg0 : i32, i32
  }
}

</mosaic_0001>

<llo_original>
// kernel: tpu_custom_call.1
$region0: #{tpu_custom_call.1}
  #allocation0 [shape = 'u32[]', space=smem, size = 0x4, offset = 0x4, fixed_abs, tag = 'smem constant byte address 0x4 - core index']
  #allocation1 [shape = 'u32[144,128]{1,0:T(1,128)}', space=vmem, size = 0x12000, scoped, tag = 'internal scratch']
  %s0 = inlined_call_operand.vmem [shape: f32[12,128], index: 0, kind: input, shape index: {}]
  %s1 = inlined_call_operand.vmem [shape: f32[64,12], index: 1, kind: input, shape index: {}]
  %s2 = inlined_call_operand.vmem [shape: f32[8,64], index: 2, kind: input, shape index: {}]
  %s3 = inlined_call_operand.hbm [shape: f32[8,128], index: 3, kind: output, shape index: {}]
  %s4 = sld [smem:[#allocation0]]
  $region22: #{tpu_custom_call.1} parent=0
    _
  %s6 = ssub.s32 1, %s4
  %s7 = scalar_select 0, %s6, %s4
  $region1: #{tpu_custom_call.1} parent=0
    #allocation2 [shape = 'u8[4096]{0}', space=vmem, size = 0x1000, scoped, tag = 'output window, operand 0, single buffered']
    #allocation3 [shape = 's32[1]{0}', space=sflag, size = 0x4, scoped, tag = 'scoped memory for tpu_custom_call.1']
    %8 = vsyncpa [#allocation3], 0
    // Predicated region
    $region2: #{tpu_custom_call.1} parent=1 // pred_check
      _
    $region3: #{tpu_custom_call.1} parent=1 // pred_check_branch
      %10 = sbr.rel (0) target = $region5
    $region4: #{tpu_custom_call.1} parent=1 // pred_region
      _
    $region5: #{tpu_custom_call.1} parent=1 // pred_fallthru
      _
    // Predicated region
    $region6: #{tpu_custom_call.1} parent=1 // pred_check
      _
    $region7: #{tpu_custom_call.1} parent=1 // pred_check_branch
      %12 = sbr.rel (0) target = $region9
    $region8: #{tpu_custom_call.1} parent=1 // pred_region
      _
    $region9: #{tpu_custom_call.1} parent=1 // pred_fallthru
      _
    // Predicated region
    $region10: #{tpu_custom_call.1} parent=1 // pred_check
      _
    $region11: #{tpu_custom_call.1} parent=1 // pred_check_branch
      %14 = sbr.rel (0) target = $region13
    $region12: #{tpu_custom_call.1} parent=1 // pred_region
      _
    $region13: #{tpu_custom_call.1} parent=1 // pred_fallthru
      _
    %v15 = vld [vmem:[%s0] sm:$0xff]
    %v16 = vld [vmem:[%s0 + $0x8] sm:$0xf]
    %vm17 = vcmask 1043456
    %v18 = vsel %vm17, %v16, -inf
    %v19 = vmax.f32 %v15, %v18
    %v20 = vrot.slane %v19, 4
    %v21 = vmax.f32 %v19, %v20
    %v22 = vrot.slane %v21, 2
    %v23 = vmax.f32 %v21, %v22
    %v24 = vrot.slane %v23, 1
    %v25 = vmax.f32 %v23, %v24
    %v26 = vsub.f32 %v15, %v25
    %v27 = vsub.f32 %v16, %v25
    %v28 = vmul.f32 %v26, 0.5
    %v29 = vmul.f32 %v27, 0.5
    %v30 = vmul.f32 %v28, 1.442695
    %v31 = vpow.pop %v30
    %v32 = vmul.f32 %v29, 1.442695
    %v33 = vpow.pop %v32
    %v34 = vmul.f32 %v31, %v31
    %v35 = vmul.f32 %v33, %v33
    %v36 = vsel %vm17, %v35, 0.0
    %v37 = vadd.f32 %v34, %v36
    %v38 = vrot.slane %v37, 4
    %v39 = vadd.f32 %v37, %v38
    %v40 = vrot.slane %v39, 2
    %v41 = vadd.f32 %v39, %v40
    %v42 = vrot.slane %v41, 1
    %v43 = vadd.f32 %v41, %v42
    %v44 = vld [vmem:[%s1] sm:$0xff]
    %v45 = vld [vmem:[%s1 + $0x8] sm:$0xff]
    %v46 = vld [vmem:[%s1 + $0x10] sm:$0xff]
    %v47 = vld [vmem:[%s1 + $0x18] sm:$0xff]
    %v48 = vld [vmem:[%s1 + $0x20] sm:$0xff]
    %v49 = vld [vmem:[%s1 + $0x28] sm:$0xff]
    %v50 = vld [vmem:[%s1 + $0x30] sm:$0xff]
    %v51 = vld [vmem:[%s1 + $0x38] sm:$0xff]
    %vm52 = vcmask 97280
    %v54 = vsel %vm52, %v44, 0
    %v57 = vsel %vm52, %v45, 0
    %v60 = vsel %vm52, %v46, 0
    %v63 = vsel %vm52, %v47, 0
    %v66 = vsel %vm52, %v48, 0
    %v69 = vsel %vm52, %v49, 0
    %v72 = vsel %vm52, %v50, 0
    %v75 = vsel %vm52, %v51, 0
    %v78 = vsel %vm17, %v33, 0
    %80 = vmatprep.subr.mxu0 0.0
    %81 = vmatpush1.msra.mxu0 0.0
    %82 = vmatprep.subr.mxu0 0.0
    %83 = vmatpush1.msra.mxu0 0.0
    %84 = vmatprep.subr.mxu0 0.0
    %85 = vmatpush1.msra.mxu0 0.0
    %86 = vmatprep.subr.mxu0 0.0
    %87 = vmatpush1.msra.mxu0 0.0
    %88 = vmatprep.subr.mxu0 0.0
    %89 = vmatpush1.msra.mxu0 0.0
    %90 = vmatprep.subr.mxu0 0.0
    %91 = vmatpush1.msra.mxu0 0.0
    %92 = vmatprep.subr.mxu0 0.0
    %93 = vmatpush1.msra.mxu0 0.0
    %94 = vmatprep.subr.mxu0 0.0
    %95 = vmatpush1.msra.mxu0 0.0
    %96 = vmatprep.subr.mxu0 0.0
    %97 = vmatpush1.msra.mxu0 0.0
    %98 = vmatprep.subr.mxu0 0.0
    %99 = vmatpush1.msra.mxu0 0.0
    %100 = vmatprep.subr.mxu0 0.0
    %101 = vmatpush1.msra.mxu0 0.0
    %102 = vmatprep.subr.mxu0 0.0
    %103 = vmatpush1.msra.mxu0 0.0
    %104 = vmatprep.subr.mxu0 0.0
    %105 = vmatpush1.msra.mxu0 0.0
    %106 = vmatprep.subr.mxu0 0.0
    %107 = vmatpush1.msra.mxu0 0.0
    %108 = vmatprep.subr.mxu0 0.0
    %109 = vmatpush1.msra.mxu0 %v78
    %110 = vmatprep.subr.mxu0 0.0
    %111 = vmatpush1.msra.mxu0 %v31
    %112 = vmatprep.subr.mxu0 0.0
    %113 = vmatpush2.msra.mxu0 0.0
    %114 = vmatprep.subr.mxu0 0.0
    %115 = vmatpush2.msra.mxu0 0.0
    %116 = vmatprep.subr.mxu0 0.0
    %117 = vmatpush2.msra.mxu0 0.0
    %118 = vmatprep.subr.mxu0 0.0
    %119 = vmatpush2.msra.mxu0 0.0
    %120 = vmatprep.subr.mxu0 0.0
    %121 = vmatpush2.msra.mxu0 0.0
    %122 = vmatprep.subr.mxu0 0.0
    %123 = vmatpush2.msra.mxu0 0.0
    %124 = vmatprep.subr.mxu0 0.0
    %125 = vmatpush2.msra.mxu0 0.0
    %126 = vmatprep.subr.mxu0 0.0
    %127 = vmatpush2.msra.mxu0 0.0
    %128 = vmatprep.subr.mxu0 0.0
    %129 = vmatpush2.msra.mxu0 0.0
    %130 = vmatprep.subr.mxu0 0.0
    %131 = vmatpush2.msra.mxu0 0.0
    %132 = vmatprep.subr.mxu0 0.0
    %133 = vmatpush2.msra.mxu0 0.0
    %134 = vmatprep.subr.mxu0 0.0
    %135 = vmatpush2.msra.mxu0 0.0
    %136 = vmatprep.subr.mxu0 0.0
    %137 = vmatpush2.msra.mxu0 0.0
    %138 = vmatprep.subr.mxu0 0.0
    %139 = vmatpush2.msra.mxu0 0.0
    %140 = vmatprep.subr.mxu0 0.0
    %141 = vmatpush2.msra.mxu0 0.0
    %142 = vmatprep.subr.mxu0 0.0
    %143 = vmatpush2.msra.mxu0 0.0
    %144 = vmatprep.mubr.f32.mxu0 0.0
    %145 = vmatmul.mubr.f32.gmra.mxu0 %v54
    %v146 = vpop.f32.mrf.mxu0
    %v147 = vadd.f32 0.0, %v146
    %v148 = vpop.f32.mrf.mxu0
    %149 = vmatprep.mubr.f32.mxu0 0.0
    %150 = vmatmul.mubr.f32.gmra.mxu0 %v57
    %v151 = vpop.f32.mrf.mxu0
    %v152 = vadd.f32 0.0, %v151
    %v153 = vpop.f32.mrf.mxu0
    %154 = vmatprep.mubr.f32.mxu0 0.0
    %155 = vmatmul.mubr.f32.gmra.mxu0 %v60
    %v156 = vpop.f32.mrf.mxu0
    %v157 = vadd.f32 0.0, %v156
    %v158 = vpop.f32.mrf.mxu0
    %159 = vmatprep.mubr.f32.mxu0 0.0
    %160 = vmatmul.mubr.f32.gmra.mxu0 %v63
    %v161 = vpop.f32.mrf.mxu0
    %v162 = vadd.f32 0.0, %v161
    %v163 = vpop.f32.mrf.mxu0
    %164 = vmatprep.mubr.f32.mxu0 0.0
    %165 = vmatmul.mubr.f32.gmra.mxu0 %v66
    %v166 = vpop.f32.mrf.mxu0
    %v167 = vadd.f32 0.0, %v166
    %v168 = vpop.f32.mrf.mxu0
    %169 = vmatprep.mubr.f32.mxu0 0.0
    %170 = vmatmul.mubr.f32.gmra.mxu0 %v69
    %v171 = vpop.f32.mrf.mxu0
    %v172 = vadd.f32 0.0, %v171
    %v173 = vpop.f32.mrf.mxu0
    %174 = vmatprep.mubr.f32.mxu0 0.0
    %175 = vmatmul.mubr.f32.gmra.mxu0 %v72
    %v176 = vpop.f32.mrf.mxu0
    %v177 = vadd.f32 0.0, %v176
    %v178 = vpop.f32.mrf.mxu0
    %179 = vmatprep.mubr.f32.mxu0 0.0
    %180 = vmatmul.mubr.f32.gmra.mxu0 %v75
    %v181 = vpop.f32.mrf.mxu0
    %v182 = vadd.f32 0.0, %v181
    %v183 = vpop.f32.mrf.mxu0
    %184 = vdwg.mxu0
    %v185 = vmul.f32 %v147, %v147
    %v186 = vmul.f32 %v152, %v152
    %v187 = vmul.f32 %v157, %v157
    %v188 = vmul.f32 %v162, %v162
    %v189 = vmul.f32 %v167, %v167
    %v190 = vmul.f32 %v172, %v172
    %v191 = vmul.f32 %v177, %v177
    %v192 = vmul.f32 %v182, %v182
    %v193 = vld [vmem:[%s2] sm:$0xff]
    %vm194 = vcmask 523264
    %v196 = vsel %vm194, %v193, 0
    %198 = vmatprep.subr.mxu0 0.0
    %199 = vmatpush1.msra.mxu0 0.0
    %200 = vmatprep.subr.mxu0 0.0
    %201 = vmatpush1.msra.mxu0 0.0
    %202 = vmatprep.subr.mxu0 0.0
    %203 = vmatpush1.msra.mxu0 0.0
    %204 = vmatprep.subr.mxu0 0.0
    %205 = vmatpush1.msra.mxu0 0.0
    %206 = vmatprep.subr.mxu0 0.0
    %207 = vmatpush1.msra.mxu0 0.0
    %208 = vmatprep.subr.mxu0 0.0
    %209 = vmatpush1.msra.mxu0 0.0
    %210 = vmatprep.subr.mxu0 0.0
    %211 = vmatpush1.msra.mxu0 0.0
    %212 = vmatprep.subr.mxu0 0.0
    %213 = vmatpush1.msra.mxu0 0.0
    %214 = vmatprep.subr.mxu0 0.0
    %215 = vmatpush1.msra.mxu0 %v192
    %216 = vmatprep.subr.mxu0 0.0
    %217 = vmatpush1.msra.mxu0 %v191
    %218 = vmatprep.subr.mxu0 0.0
    %219 = vmatpush1.msra.mxu0 %v190
    %220 = vmatprep.subr.mxu0 0.0
    %221 = vmatpush1.msra.mxu0 %v189
    %222 = vmatprep.subr.mxu0 0.0
    %223 = vmatpush1.msra.mxu0 %v188
    %224 = vmatprep.subr.mxu0 0.0
    %225 = vmatpush1.msra.mxu0 %v187
    %226 = vmatprep.subr.mxu0 0.0
    %227 = vmatpush1.msra.mxu0 %v186
    %228 = vmatprep.subr.mxu0 0.0
    %229 = vmatpush1.msra.mxu0 %v185
    %230 = vmatprep.subr.mxu0 0.0
    %231 = vmatpush2.msra.mxu0 0.0
    %232 = vmatprep.subr.mxu0 0.0
    %233 = vmatpush2.msra.mxu0 0.0
    %234 = vmatprep.subr.mxu0 0.0
    %235 = vmatpush2.msra.mxu0 0.0
    %236 = vmatprep.subr.mxu0 0.0
    %237 = vmatpush2.msra.mxu0 0.0
    %238 = vmatprep.subr.mxu0 0.0
    %239 = vmatpush2.msra.mxu0 0.0
    %240 = vmatprep.subr.mxu0 0.0
    %241 = vmatpush2.msra.mxu0 0.0
    %242 = vmatprep.subr.mxu0 0.0
    %243 = vmatpush2.msra.mxu0 0.0
    %244 = vmatprep.subr.mxu0 0.0
    %245 = vmatpush2.msra.mxu0 0.0
    %246 = vmatprep.subr.mxu0 0.0
    %247 = vmatpush2.msra.mxu0 0.0
    %248 = vmatprep.subr.mxu0 0.0
    %249 = vmatpush2.msra.mxu0 0.0
    %250 = vmatprep.subr.mxu0 0.0
    %251 = vmatpush2.msra.mxu0 0.0
    %252 = vmatprep.subr.mxu0 0.0
    %253 = vmatpush2.msra.mxu0 0.0
    %254 = vmatprep.subr.mxu0 0.0
    %255 = vmatpush2.msra.mxu0 0.0
    %256 = vmatprep.subr.mxu0 0.0
    %257 = vmatpush2.msra.mxu0 0.0
    %258 = vmatprep.subr.mxu0 0.0
    %259 = vmatpush2.msra.mxu0 0.0
    %260 = vmatprep.subr.mxu0 0.0
    %261 = vmatpush2.msra.mxu0 0.0
    %262 = vmatprep.mubr.f32.mxu0 0.0
    %263 = vmatmul.mubr.f32.gmra.mxu0 %v196
    %v264 = vpop.f32.mrf.mxu0
    %v265 = vadd.f32 0.0, %v264
    %v266 = vpop.f32.mrf.mxu0
    %267 = vdwg.mxu0
    %v268 = vrcp.pop %v43
    %v269 = vmul.f32 %v265, %v268
    %270 = vst [vmem:[#allocation2] sm:$0xff] %v269
    // Predicated region
    $region14: #{tpu_custom_call.1} parent=1 // pred_check
      _
    $region15: #{tpu_custom_call.1} parent=1 // pred_check_branch
      %272 = sbr.rel (0) target = $region17
    $region16: #{tpu_custom_call.1} parent=1 // pred_region
      %s274 = ssub.s32 128, 128
      %275 = vsyncadd [#allocation3], %s274
      %s277 = sshll.u32 [#allocation2], 4
      %s278 = int_to_ptr.vmem [resolvable:$true] %s277
      %280 = dma.vmem_to_hbm [thread:$0]  %s278, 128, %s3, [#allocation3]
    $region17: #{tpu_custom_call.1} parent=1 // pred_fallthru
      _
    // Predicated region
    $region18: #{tpu_custom_call.1} parent=1 // pred_check
      _
    $region19: #{tpu_custom_call.1} parent=1 // pred_check_branch
      %282 = sbr.rel (0) target = $region21
    $region20: #{tpu_custom_call.1} parent=1 // pred_region
      %283 = dma.done [#allocation3], 128
    $region21: #{tpu_custom_call.1} parent=1 // pred_fallthru
      _
    %284 = vsyncpa [#allocation3], 1

</llo_original>
